<compile_context>
chip_gen: v6e
topology: v6e:2x2x1
jax: 0.10.0
libtpu: 0.0.40
codegen_flags: <defaults>
</compile_context>

<pallas_src>
from functools import partial

import jax
import jax.numpy as jnp
from jax.experimental import pallas as pl
from jax.experimental.pallas import tpu as pltpu


_VMEM_LIMIT_CACHE = None


def _vmem_limit_bytes():
    """Scoped-VMEM budget: ~half of physical VMEM (64 MiB on 128 MiB v5e/v6e,
    32 MiB on 64 MiB v7x), clamped to [32, 96] MiB."""
    global _VMEM_LIMIT_CACHE
    if _VMEM_LIMIT_CACHE is None:
        cap = 128 * 1024 * 1024
        try:
            cap = int(pltpu.get_tpu_info().vmem_capacity_bytes)
        except Exception:
            pass
        _VMEM_LIMIT_CACHE = int(min(96 * 1024 * 1024,
                                    max(32 * 1024 * 1024, cap // 2)))
    return _VMEM_LIMIT_CACHE


# ---------------------------------------------------------------------------
# Kernel A:  relu(bn1(x)) @ W1'  ->  relu(. + b2)          (fused stage 1)
#            (bn2 scale is folded into W1' at wrapper time)
# ---------------------------------------------------------------------------
def _stage1_kernel(x_ref, s1_ref, b1_ref, w1_ref, b2_ref, o_ref, *, compute_dtype):
    # bn + relu in f32 on the VPU; matmul operands in compute_dtype on the MXU,
    # accumulation in f32.
    a = jnp.maximum(x_ref[...].astype(jnp.float32) * s1_ref[...] + b1_ref[...], 0.0)
    t = jnp.dot(a.astype(compute_dtype), w1_ref[...],
                preferred_element_type=jnp.float32)
    o_ref[...] = jnp.maximum(t + b2_ref[...], 0.0).astype(o_ref.dtype)


def stage1(x2d, scale1, bias1, w1, bias2, *, compute_dtype, out_dtype):
    M, Cin = x2d.shape
    P = w1.shape[1]
    # Large row tile amortizes per-step pipeline overhead; cdiv grid + masked
    # last tile keeps VMEM bounded when M is not a multiple of the tile.
    bm = M if M <= 1024 else 1024
    grid = (pl.cdiv(M, bm),)
    kernel = partial(_stage1_kernel, compute_dtype=compute_dtype)
    return pl.pallas_call(
        kernel,
        out_shape=jax.ShapeDtypeStruct((M, P), out_dtype),
        grid=grid,
        in_specs=[
            pl.BlockSpec((bm, Cin), lambda i: (i, 0)),
            pl.BlockSpec((1, Cin), lambda i: (0, 0)),
            pl.BlockSpec((1, Cin), lambda i: (0, 0)),
            pl.BlockSpec((Cin, P), lambda i: (0, 0)),
            pl.BlockSpec((1, P), lambda i: (0, 0)),
        ],
        out_specs=pl.BlockSpec((bm, P), lambda i: (i, 0)),
        compiler_params=pltpu.CompilerParams(
            dimension_semantics=("parallel",),
            vmem_limit_bytes=_vmem_limit_bytes()),
    )(x2d, scale1, bias1, w1, bias2)


# ---------------------------------------------------------------------------
# Kernel B:  conv2(3x3, stride s, pad 1) + (b3,relu) + conv3(1x1) + shortcut
# ---------------------------------------------------------------------------
def stage2(act_or_phases, w2s, bias3, w3, res2d, scale1, bias1, wsc, *,
           N, H, W, Ho, Wo, stride, compute_dtype, out_dtype):
    s = stride
    P = w3.shape[0]
    Cout = w3.shape[1]
    Cres = res2d.shape[1]
    has_wsc = wsc is not None
    MB = Ho * Wo                                   # output rows per batch image

    if s == 1:
        phases = [act_or_phases]                   # (N, H, W, P), UNPADDED
        ph_shapes = [(1, H, W, P)]
    else:
        phases = list(act_or_phases)               # s*s padded stride-phases
        ph_shapes = [(1, p.shape[1], p.shape[2], P) for p in phases]
    n_phase = len(phases)
    act_dtype = phases[0].dtype

    def kernel(*refs):
        idx = 0
        ph_refs = refs[idx: idx + n_phase]; idx += n_phase
        w2_ref = refs[idx]; idx += 1               # (3, 3P, P)  rows = kx-major
        b3_ref = refs[idx]; idx += 1               # (1, P)
        w3_ref = refs[idx]; idx += 1               # (P, Cout)
        res_ref = refs[idx]; idx += 1              # (MB, Cres)
        rs1_ref = refs[idx]; idx += 1              # (1, Cres)
        rb1_ref = refs[idx]; idx += 1              # (1, Cres)
        wsc_ref = None
        if has_wsc:
            wsc_ref = refs[idx]; idx += 1          # (Cres, Cout)
        o_ref = refs[idx]; idx += 1                # (MB, Cout)
        scr_ref = refs[idx] if s == 1 else None    # (H+2, W+2, P) VMEM scratch

        if s == 1:
            # In-VMEM zero-pad of act2: removes the wrapper pad + phase-split
            # HBM round trip for the (common) stride-1 case.  Re-zeroed every
            # step so the "parallel" grid axis stays megacore-safe.
            scr_ref[...] = jnp.zeros_like(scr_ref)
            scr_ref[1:H + 1, 1:W + 1, :] = ph_refs[0][0]

            def tap(ky, kx):
                return scr_ref[ky: ky + Ho, kx: kx + Wo, :]
        else:
            def tap(ky, kx):
                ph = ph_refs[(ky % s) * s + (kx % s)]
                return ph[0, ky // s: ky // s + Ho, kx // s: kx // s + Wo, :]

        # --- 3x3 stride-s conv: per ky, concatenate the 3 kx taps along the
        #     contraction dim -> ONE (MB, 3P) @ (3P, P) MXU matmul.  All data
        #     stays in VMEM; f32 accumulation. ---
        acc = jnp.zeros((MB, P), jnp.float32)
        for ky in range(3):
            lhs = jnp.concatenate([tap(ky, kx) for kx in range(3)], axis=-1)
            acc = acc + jnp.dot(lhs.reshape(MB, 3 * P).astype(compute_dtype),
                                w2_ref[ky], preferred_element_type=jnp.float32)

        # --- bn3 (scale pre-folded into w2) + relu, then conv3 (1x1) on MXU ---
        a3 = jnp.maximum(acc + b3_ref[...], 0.0)
        out = jnp.dot(a3.astype(compute_dtype), w3_ref[...],
                      preferred_element_type=jnp.float32)

        # --- shortcut: relu(bn1(x)) [@ Wsc], fused; residual add in f32 ---
        r = jnp.maximum(
            res_ref[...].astype(jnp.float32) * rs1_ref[...] + rb1_ref[...], 0.0)
        if has_wsc:
            r = jnp.dot(r.astype(compute_dtype), wsc_ref[...],
                        preferred_element_type=jnp.float32)

        o_ref[...] = (out + r).astype(o_ref.dtype)

    in_specs = [pl.BlockSpec(shp, lambda n: (n, 0, 0, 0)) for shp in ph_shapes]
    in_specs += [
        pl.BlockSpec((3, 3 * P, P), lambda n: (0, 0, 0)),
        pl.BlockSpec((1, P), lambda n: (0, 0)),
        pl.BlockSpec((P, Cout), lambda n: (0, 0)),
        pl.BlockSpec((MB, Cres), lambda n: (n, 0)),
        pl.BlockSpec((1, Cres), lambda n: (0, 0)),
        pl.BlockSpec((1, Cres), lambda n: (0, 0)),
    ]
    inputs = phases + [w2s, bias3, w3, res2d, scale1, bias1]
    if has_wsc:
        in_specs.append(pl.BlockSpec((Cres, Cout), lambda n: (0, 0)))
        inputs.append(wsc)
    scratch = [pltpu.VMEM((H + 2, W + 2, P), act_dtype)] if s == 1 else []

    return pl.pallas_call(
        kernel,
        out_shape=jax.ShapeDtypeStruct((N * MB, Cout), out_dtype),
        grid=(N,),
        in_specs=in_specs,
        out_specs=pl.BlockSpec((MB, Cout), lambda n: (n, 0)),
        scratch_shapes=scratch,
        compiler_params=pltpu.CompilerParams(
            dimension_semantics=("parallel",),
            vmem_limit_bytes=_vmem_limit_bytes()),
    )(*inputs)


# --------------------------- glue (plain JAX) --------------------------------
def _fold_bn(gamma, beta, mean, var, eps=1e-5):
    scale = gamma / jnp.sqrt(var + eps)
    bias = beta - mean * scale
    return scale[None, :].astype(jnp.float32), bias[None, :].astype(jnp.float32)


# --------------------------- module forward ----------------------------------
def preact_bottleneck_forward(x_nchw, params, stride, *,
                              compute_dtype=jnp.float32, out_dtype=None):
    N, Cin, H, W = x_nchw.shape
    if out_dtype is None:
        out_dtype = x_nchw.dtype
    # Keep the network's native dtype end-to-end (no wrapper-side f32 upcast);
    # the kernels do BN/ReLU math in f32 internally.
    # TODO(synk): keep the whole network NHWC to drop these transposes.
    x = jnp.transpose(x_nchw, (0, 2, 3, 1))               # NHWC, native dtype

    scale1, bias1 = _fold_bn(*params["bn1"])
    scale2, bias2 = _fold_bn(*params["bn2"])
    scale3, bias3 = _fold_bn(*params["bn3"])

    cdt = compute_dtype
    P = params["w1"].shape[1]
    Cout = params["w3"].shape[1]

    # Fold bn2 / bn3 scales into the producing conv weights (valid: inference-
    # folded BN, no nonlinearity in between) — kernels only do bias-add + relu.
    w1 = (params["w1"].astype(jnp.float32) * scale2).astype(cdt)        # (Cin, P)
    w2s = (params["w2t"].astype(jnp.float32) * scale3                   # (9,P,P)*(1,P)
           ).reshape(3, 3 * P, P).astype(cdt)                           # per-ky stacked
    w3 = params["w3"].astype(cdt)                                       # (P, 4P)
    wsc = params["wsc"].astype(cdt) if params["wsc"] is not None else None

    s = stride
    Ho = (H + 2 - 3) // s + 1
    Wo = (W + 2 - 3) // s + 1

    if wsc is None:
        # Module spec: shortcut = relu(bn1(x)) when there is no projection conv.
        assert s == 1 and Cin == Cout, \
            "identity shortcut requires stride == 1 and in_planes == 4*planes"

    # stage 1: act2 = relu(bn2(conv1(relu(bn1(x)))))   — one fused kernel
    x2d = x.reshape(N * H * W, Cin)
    act2 = stage1(x2d, scale1, bias1, w1, bias2, compute_dtype=cdt, out_dtype=cdt)

    if s == 1:
        # act2 goes straight into stage2; the +/-1 halo is built in VMEM inside
        # the kernel — no pad / phase-split HBM round trip.
        act_or_phases = act2.reshape(N, H, W, P)
        res2d = x2d
    else:
        # TODO(synk): stride-2 still does one pad + stride-phase split pass of
        # act2 (stride-2 blocks are one per ResNet stage, so this is minor).
        Hp = -(-(H + 2) // s) * s
        Wp = -(-(W + 2) // s) * s
        a4 = act2.reshape(N, H, W, P)
        xpad = jnp.pad(a4, ((0, 0), (1, Hp - H - 1), (1, Wp - W - 1), (0, 0)))
        act_or_phases = [xpad[:, py::s, px::s, :]
                         for py in range(s) for px in range(s)]
        # bn1 is per-channel, so subsampling x first is equivalent to
        # subsampling relu(bn1(x)); the bn1+relu (+1x1 conv) run inside stage2.
        res2d = x[:, ::s, ::s, :].reshape(N * Ho * Wo, Cin)

    out2d = stage2(act_or_phases, w2s, bias3, w3, res2d, scale1, bias1, wsc,
                   N=N, H=H, W=W, Ho=Ho, Wo=Wo, stride=s,
                   compute_dtype=cdt, out_dtype=out_dtype)
    out = out2d.reshape(N, Ho, Wo, Cout)
    return jnp.transpose(out, (0, 3, 1, 2))               # back to NCHW


# --------------------------- pure-JAX reference -------------------------------
def _ref_forward(x_nchw, raw, stride, eps=1e-5):
    x = jnp.transpose(x_nchw, (0, 2, 3, 1)).astype(jnp.float32)

    def bn(t, p):
        g, b, m, v = p
        return g * (t - m) / jnp.sqrt(v + eps) + b

    def conv(t, w_oihw, s, padding):
        w = jnp.transpose(w_oihw, (2, 3, 1, 0))            # OIHW -> HWIO
        return jax.lax.conv_general_dilated(
            t, w, (s, s), padding, dimension_numbers=("NHWC", "HWIO", "NHWC"),
            precision=jax.lax.Precision.HIGHEST)

    pre = jax.nn.relu(bn(x, raw["bn1"]))
    shortcut = conv(pre, raw["wsc"], stride, "VALID") if raw["wsc"] is not None else pre
    out = conv(pre, raw["w1"], 1, "VALID")
    out = conv(jax.nn.relu(bn(out, raw["bn2"])), raw["w2"], stride, [(1, 1), (1, 1)])
    out = conv(jax.nn.relu(bn(out, raw["bn3"])), raw["w3"], 1, "VALID")
    out = out + shortcut
    return jnp.transpose(out, (0, 3, 1, 2))


# ------------------------------- test harness ---------------------------------
def _make_params(key, in_planes, planes, stride):
    expansion = 4
    out_planes = expansion * planes
    ks = jax.random.split(key, 8)

    def bn_params(k, c):
        k1, k2, k3, k4 = jax.random.split(k, 4)
        gamma = 1.0 + 0.1 * jax.random.normal(k1, (c,), jnp.float32)
        beta = 0.1 * jax.random.normal(k2, (c,), jnp.float32)
        mean = 0.1 * jax.random.normal(k3, (c,), jnp.float32)
        var = jax.random.uniform(k4, (c,), jnp.float32, 0.5, 1.5)
        return (gamma, beta, mean, var)

    raw = {
        "bn1": bn_params(ks[0], in_planes),
        "bn2": bn_params(ks[1], planes),
        "bn3": bn_params(ks[2], planes),
        "w1": 0.1 * jax.random.normal(ks[3], (planes, in_planes, 1, 1), jnp.float32),
        "w2": 0.1 * jax.random.normal(ks[4], (planes, planes, 3, 3), jnp.float32),
        "w3": 0.1 * jax.random.normal(ks[5], (out_planes, planes, 1, 1), jnp.float32),
        "wsc": (0.1 * jax.random.normal(ks[6], (out_planes, in_planes, 1, 1),
                                        jnp.float32)
                if (stride != 1 or in_planes != out_planes) else None),
    }
    params = {
        "bn1": raw["bn1"], "bn2": raw["bn2"], "bn3": raw["bn3"],
        "w1": raw["w1"][:, :, 0, 0].T,                                    # (Cin, P)
        "w2t": jnp.transpose(raw["w2"], (2, 3, 1, 0)).reshape(9, planes, planes),
        "w3": raw["w3"][:, :, 0, 0].T,                                    # (P, 4P)
        "wsc": raw["wsc"][:, :, 0, 0].T if raw["wsc"] is not None else None,
    }
    return raw, params, ks[7]


def _run_case(name, key, N, in_planes, planes, H, W, stride,
              compute_dtype, out_dtype, atol, rtol):
    raw, params, kx = _make_params(key, in_planes, planes, stride)
    x = jax.random.normal(kx, (N, in_planes, H, W), jnp.float32)   # NCHW

    out = jax.block_until_ready(
        preact_bottleneck_forward(x, params, stride,
                                  compute_dtype=compute_dtype,
                                  out_dtype=out_dtype))
    ref = jax.block_until_ready(_ref_forward(x, raw, stride))

    assert out.shape == ref.shape, (name, out.shape, ref.shape)
    err = float(jnp.max(jnp.abs(out.astype(jnp.float32) - ref)))
    assert jnp.allclose(out.astype(jnp.float32), ref, atol=atol, rtol=rtol), (name, err)


if __name__ == "__main__":
    key = jax.random.PRNGKey(0)
    k1, k2, k3 = jax.random.split(key, 3)

    # projection shortcut, stride 2 (wrapper stride-phase path), f32 compute
    _run_case("proj_s2_f32", k1, N=2, in_planes=16, planes=8, H=16, W=16, stride=2,
              compute_dtype=jnp.float32, out_dtype=jnp.float32, atol=5e-3, rtol=5e-3)
    # identity shortcut, stride 1 (in-VMEM halo path), f32 compute
    _run_case("ident_s1_f32", k2, N=2, in_planes=32, planes=8, H=8, W=8, stride=1,
              compute_dtype=jnp.float32, out_dtype=jnp.float32, atol=5e-3, rtol=5e-3)
    # projection shortcut, stride 1, bf16 MXU operands + bf16 writeback
    _run_case("proj_s1_bf16", k3, N=2, in_planes=16, planes=8, H=16, W=16, stride=1,
              compute_dtype=jnp.bfloat16, out_dtype=jnp.bfloat16, atol=1e-1, rtol=5e-2)

    print("KERNEL_OK")
</pallas_src>

<mosaic_0001>
module attributes {stable_mosaic.version = 11 : i64} {
  func.func @_stage1_kernel(%arg0: i32, %arg1: memref<512x16xf32, #tpu.memory_space<vmem>>, %arg2: memref<1x16xf32, #tpu.memory_space<vmem>>, %arg3: memref<1x16xf32, #tpu.memory_space<vmem>>, %arg4: memref<16x8xf32, #tpu.memory_space<vmem>>, %arg5: memref<1x8xf32, #tpu.memory_space<vmem>>, %arg6: memref<512x8xf32, #tpu.memory_space<vmem>>) attributes {dimension_semantics = [#tpu.dimension_semantics<parallel>], iteration_bounds = array<i64: 1>, scalar_prefetch = 0 : i64, scratch_operands = 0 : i64, tpu.core_type = #tpu.core_type<tc>, window_params = [{transform_indices = @transform_0, window_bounds = array<i64: 512, 16>}, {pipeline_mode = #tpu.pipeline_mode<synchronous>, transform_indices = @transform_1, window_bounds = array<i64: 1, 16>}, {pipeline_mode = #tpu.pipeline_mode<synchronous>, transform_indices = @transform_2, window_bounds = array<i64: 1, 16>}, {pipeline_mode = #tpu.pipeline_mode<synchronous>, transform_indices = @transform_3, window_bounds = array<i64: 16, 8>}, {pipeline_mode = #tpu.pipeline_mode<synchronous>, transform_indices = @transform_4, window_bounds = array<i64: 1, 8>}, {transform_indices = @transform_5, window_bounds = array<i64: 512, 8>}]} {
    %c0 = arith.constant 0 : index
    %c0_0 = arith.constant 0 : index
    %0 = vector.load %arg1[%c0, %c0_0] : memref<512x16xf32, #tpu.memory_space<vmem>>, vector<512x16xf32>
    %c0_1 = arith.constant 0 : index
    %c0_2 = arith.constant 0 : index
    %1 = vector.load %arg2[%c0_1, %c0_2] : memref<1x16xf32, #tpu.memory_space<vmem>>, vector<1x16xf32>
    %2 = vector.broadcast %1 : vector<1x16xf32> to vector<512x16xf32>
    %3 = arith.mulf %0, %2 : vector<512x16xf32>
    %c0_3 = arith.constant 0 : index
    %c0_4 = arith.constant 0 : index
    %4 = vector.load %arg3[%c0_3, %c0_4] : memref<1x16xf32, #tpu.memory_space<vmem>>, vector<1x16xf32>
    %5 = vector.broadcast %4 : vector<1x16xf32> to vector<512x16xf32>
    %6 = arith.addf %3, %5 : vector<512x16xf32>
    %cst = arith.constant 0.000000e+00 : f32
    %7 = vector.broadcast %cst : f32 to vector<512x16xf32>
    %8 = arith.maximumf %6, %7 : vector<512x16xf32>
    %c0_5 = arith.constant 0 : index
    %c0_6 = arith.constant 0 : index
    %9 = vector.load %arg4[%c0_5, %c0_6] : memref<16x8xf32, #tpu.memory_space<vmem>>, vector<16x8xf32>
    %cst_7 = arith.constant dense<0.000000e+00> : vector<512x8xf32>
    %10 = tpu.matmul %8, %9, %cst_7 {dimension_numbers = #tpu.dot_dimension_numbers<[1], [0], [0], [1], [0, 0, 1, 1], [], []>} : vector<512x16xf32>, vector<16x8xf32>, vector<512x8xf32> -> vector<512x8xf32>
    %c0_8 = arith.constant 0 : index
    %c0_9 = arith.constant 0 : index
    %11 = vector.load %arg5[%c0_8, %c0_9] : memref<1x8xf32, #tpu.memory_space<vmem>>, vector<1x8xf32>
    %12 = vector.broadcast %11 : vector<1x8xf32> to vector<512x8xf32>
    %13 = arith.addf %10, %12 : vector<512x8xf32>
    %cst_10 = arith.constant 0.000000e+00 : f32
    %14 = vector.broadcast %cst_10 : f32 to vector<512x8xf32>
    %15 = arith.maximumf %13, %14 : vector<512x8xf32>
    %c0_11 = arith.constant 0 : index
    %c0_12 = arith.constant 0 : index
    %16 = vector.load %arg6[%c0_11, %c0_12] : memref<512x8xf32, #tpu.memory_space<vmem>>, vector<512x8xf32>
    tpu.vector_store %arg6[%c0_11, %c0_12], %15 {strides = array<i32>} : memref<512x8xf32, #tpu.memory_space<vmem>>, vector<512x8xf32>,
    return
  }
  func.func @transform_0(%arg0: i32) -> (i32, i32) {
    %c0_i32 = arith.constant 0 : i32
    %c0_i32_0 = arith.constant 0 : i32
    return %arg0, %c0_i32 : i32, i32
  }
  func.func @transform_1(%arg0: i32) -> (i32, i32) {
    %c0_i32 = arith.constant 0 : i32
    %c0_i32_0 = arith.constant 0 : i32
    %c0_i32_1 = arith.constant 0 : i32
    return %c0_i32, %c0_i32_0 : i32, i32
  }
  func.func @transform_2(%arg0: i32) -> (i32, i32) {
    %c0_i32 = arith.constant 0 : i32
    %c0_i32_0 = arith.constant 0 : i32
    %c0_i32_1 = arith.constant 0 : i32
    return %c0_i32, %c0_i32_0 : i32, i32
  }
  func.func @transform_3(%arg0: i32) -> (i32, i32) {
    %c0_i32 = arith.constant 0 : i32
    %c0_i32_0 = arith.constant 0 : i32
    %c0_i32_1 = arith.constant 0 : i32
    return %c0_i32, %c0_i32_0 : i32, i32
  }
  func.func @transform_4(%arg0: i32) -> (i32, i32) {
    %c0_i32 = arith.constant 0 : i32
    %c0_i32_0 = arith.constant 0 : i32
    %c0_i32_1 = arith.constant 0 : i32
    return %c0_i32, %c0_i32_0 : i32, i32
  }
  func.func @transform_5(%arg0: i32) -> (i32, i32) {
    %c0_i32 = arith.constant 0 : i32
    %c0_i32_0 = arith.constant 0 : i32
    return %arg0, %c0_i32 : i32, i32
  }
}

</mosaic_0001>

<llo_original>
// kernel: tpu_custom_call.1
$region0: #{tpu_custom_call.1}
  #allocation0 [shape = 'u32[]', space=smem, size = 0x4, offset = 0x4, fixed_abs, tag = 'smem constant byte address 0x4 - core index']
  #allocation1 [shape = 'u32[144,128]{1,0:T(1,128)}', space=vmem, size = 0x12000, scoped, tag = 'internal scratch']
  %s0 = inlined_call_operand.vmem [shape: f32[512,16], index: 0, kind: input, shape index: {}]
  %s1 = inlined_call_operand.vmem [shape: f32[1,16], index: 1, kind: input, shape index: {}]
  %s2 = inlined_call_operand.vmem [shape: f32[1,16], index: 2, kind: input, shape index: {}]
  %s3 = inlined_call_operand.vmem [shape: f32[16,8], index: 3, kind: input, shape index: {}]
  %s4 = inlined_call_operand.vmem [shape: f32[1,8], index: 4, kind: input, shape index: {}]
  %s5 = inlined_call_operand.vmem [shape: f32[512,8], index: 5, kind: output, shape index: {}]
  %s6 = sld [smem:[#allocation0]]
  $region30: #{tpu_custom_call.1} parent=0
    _
  %s8 = ssub.s32 1, %s6
  %s9 = scalar_select 0, %s8, %s6
  // Predicated region
  $region2: #{tpu_custom_call.1} parent=0 // pred_check
    _
  $region3: #{tpu_custom_call.1} parent=0 // pred_check_branch
    %11 = sbr.rel (0) target = $region5
  $region4: #{tpu_custom_call.1} parent=0 // pred_region
    _
  $region5: #{tpu_custom_call.1} parent=0 // pred_fallthru
    _
  // Predicated region
  $region6: #{tpu_custom_call.1} parent=0 // pred_check
    _
  $region7: #{tpu_custom_call.1} parent=0 // pred_check_branch
    %13 = sbr.rel (0) target = $region9
  $region8: #{tpu_custom_call.1} parent=0 // pred_region
    _
  $region9: #{tpu_custom_call.1} parent=0 // pred_fallthru
    _
  // Predicated region
  $region10: #{tpu_custom_call.1} parent=0 // pred_check
    _
  $region11: #{tpu_custom_call.1} parent=0 // pred_check_branch
    %15 = sbr.rel (0) target = $region13
  $region12: #{tpu_custom_call.1} parent=0 // pred_region
    _
  $region13: #{tpu_custom_call.1} parent=0 // pred_fallthru
    _
  // Predicated region
  $region14: #{tpu_custom_call.1} parent=0 // pred_check
    _
  $region15: #{tpu_custom_call.1} parent=0 // pred_check_branch
    %17 = sbr.rel (0) target = $region17
  $region16: #{tpu_custom_call.1} parent=0 // pred_region
    _
  $region17: #{tpu_custom_call.1} parent=0 // pred_fallthru
    _
  // Predicated region
  $region18: #{tpu_custom_call.1} parent=0 // pred_check
    _
  $region19: #{tpu_custom_call.1} parent=0 // pred_check_branch
    %19 = sbr.rel (0) target = $region21
  $region20: #{tpu_custom_call.1} parent=0 // pred_region
    _
  $region21: #{tpu_custom_call.1} parent=0 // pred_fallthru
    _
  %v20 = vld [vmem:[%s0] sm:$0xff]
  %v21 = vld [vmem:[%s0 + $0x8] sm:$0xff]
  %v22 = vld [vmem:[%s0 + $0x10] sm:$0xff]
  %v23 = vld [vmem:[%s0 + $0x18] sm:$0xff]
  %v24 = vld [vmem:[%s0 + $0x20] sm:$0xff]
  %v25 = vld [vmem:[%s0 + $0x28] sm:$0xff]
  %v26 = vld [vmem:[%s0 + $0x30] sm:$0xff]
  %v27 = vld [vmem:[%s0 + $0x38] sm:$0xff]
  %v28 = vld [vmem:[%s0 + $0x40] sm:$0xff]
  %v29 = vld [vmem:[%s0 + $0x48] sm:$0xff]
  %v30 = vld [vmem:[%s0 + $0x50] sm:$0xff]
  %v31 = vld [vmem:[%s0 + $0x58] sm:$0xff]
  %v32 = vld [vmem:[%s0 + $0x60] sm:$0xff]
  %v33 = vld [vmem:[%s0 + $0x68] sm:$0xff]
  %v34 = vld [vmem:[%s0 + $0x70] sm:$0xff]
  %v35 = vld [vmem:[%s0 + $0x78] sm:$0xff]
  %v36 = vld [vmem:[%s0 + $0x80] sm:$0xff]
  %v37 = vld [vmem:[%s0 + $0x88] sm:$0xff]
  %v38 = vld [vmem:[%s0 + $0x90] sm:$0xff]
  %v39 = vld [vmem:[%s0 + $0x98] sm:$0xff]
  %v40 = vld [vmem:[%s0 + $0xa0] sm:$0xff]
  %v41 = vld [vmem:[%s0 + $0xa8] sm:$0xff]
  %v42 = vld [vmem:[%s0 + $0xb0] sm:$0xff]
  %v43 = vld [vmem:[%s0 + $0xb8] sm:$0xff]
  %v44 = vld [vmem:[%s0 + $0xc0] sm:$0xff]
  %v45 = vld [vmem:[%s0 + $0xc8] sm:$0xff]
  %v46 = vld [vmem:[%s0 + $0xd0] sm:$0xff]
  %v47 = vld [vmem:[%s0 + $0xd8] sm:$0xff]
  %v48 = vld [vmem:[%s0 + $0xe0] sm:$0xff]
  %v49 = vld [vmem:[%s0 + $0xe8] sm:$0xff]
  %v50 = vld [vmem:[%s0 + $0xf0] sm:$0xff]
  %v51 = vld [vmem:[%s0 + $0xf8] sm:$0xff]
  %v52 = vld [vmem:[%s0 + $0x100] sm:$0xff]
  %v53 = vld [vmem:[%s0 + $0x108] sm:$0xff]
  %v54 = vld [vmem:[%s0 + $0x110] sm:$0xff]
  %v55 = vld [vmem:[%s0 + $0x118] sm:$0xff]
  %v56 = vld [vmem:[%s0 + $0x120] sm:$0xff]
  %v57 = vld [vmem:[%s0 + $0x128] sm:$0xff]
  %v58 = vld [vmem:[%s0 + $0x130] sm:$0xff]
  %v59 = vld [vmem:[%s0 + $0x138] sm:$0xff]
  %v60 = vld [vmem:[%s0 + $0x140] sm:$0xff]
  %v61 = vld [vmem:[%s0 + $0x148] sm:$0xff]
  %v62 = vld [vmem:[%s0 + $0x150] sm:$0xff]
  %v63 = vld [vmem:[%s0 + $0x158] sm:$0xff]
  %v64 = vld [vmem:[%s0 + $0x160] sm:$0xff]
  %v65 = vld [vmem:[%s0 + $0x168] sm:$0xff]
  %v66 = vld [vmem:[%s0 + $0x170] sm:$0xff]
  %v67 = vld [vmem:[%s0 + $0x178] sm:$0xff]
  %v68 = vld [vmem:[%s0 + $0x180] sm:$0xff]
  %v69 = vld [vmem:[%s0 + $0x188] sm:$0xff]
  %v70 = vld [vmem:[%s0 + $0x190] sm:$0xff]
  %v71 = vld [vmem:[%s0 + $0x198] sm:$0xff]
  %v72 = vld [vmem:[%s0 + $0x1a0] sm:$0xff]
  %v73 = vld [vmem:[%s0 + $0x1a8] sm:$0xff]
  %v74 = vld [vmem:[%s0 + $0x1b0] sm:$0xff]
  %v75 = vld [vmem:[%s0 + $0x1b8] sm:$0xff]
  %v76 = vld [vmem:[%s0 + $0x1c0] sm:$0xff]
  %v77 = vld [vmem:[%s0 + $0x1c8] sm:$0xff]
  %v78 = vld [vmem:[%s0 + $0x1d0] sm:$0xff]
  %v79 = vld [vmem:[%s0 + $0x1d8] sm:$0xff]
  %v80 = vld [vmem:[%s0 + $0x1e0] sm:$0xff]
  %v81 = vld [vmem:[%s0 + $0x1e8] sm:$0xff]
  %v82 = vld [vmem:[%s0 + $0x1f0] sm:$0xff]
  %v83 = vld [vmem:[%s0 + $0x1f8] sm:$0xff]
  %v84 = vld [vmem:[%s1] sm:$0x1]
  %v86 = vlaneseq
  %v87 = vshrl.u32 %v86, 7
  %v88 = vsub.s32 0, %v87
  %v89 = vrot.slane %v84, %v88
  %v91 = vmul.f32 %v20, %v89
  %v92 = vmul.f32 %v21, %v89
  %v93 = vmul.f32 %v22, %v89
  %v94 = vmul.f32 %v23, %v89
  %v95 = vmul.f32 %v24, %v89
  %v96 = vmul.f32 %v25, %v89
  %v97 = vmul.f32 %v26, %v89
  %v98 = vmul.f32 %v27, %v89
  %v99 = vmul.f32 %v28, %v89
  %v100 = vmul.f32 %v29, %v89
  %v101 = vmul.f32 %v30, %v89
  %v102 = vmul.f32 %v31, %v89
  %v103 = vmul.f32 %v32, %v89
  %v104 = vmul.f32 %v33, %v89
  %v105 = vmul.f32 %v34, %v89
  %v106 = vmul.f32 %v35, %v89
  %v107 = vmul.f32 %v36, %v89
  %v108 = vmul.f32 %v37, %v89
  %v109 = vmul.f32 %v38, %v89
  %v110 = vmul.f32 %v39, %v89
  %v111 = vmul.f32 %v40, %v89
  %v112 = vmul.f32 %v41, %v89
  %v113 = vmul.f32 %v42, %v89
  %v114 = vmul.f32 %v43, %v89
  %v115 = vmul.f32 %v44, %v89
  %v116 = vmul.f32 %v45, %v89
  %v117 = vmul.f32 %v46, %v89
  %v118 = vmul.f32 %v47, %v89
  %v119 = vmul.f32 %v48, %v89
  %v120 = vmul.f32 %v49, %v89
  %v121 = vmul.f32 %v50, %v89
  %v122 = vmul.f32 %v51, %v89
  %v123 = vmul.f32 %v52, %v89
  %v124 = vmul.f32 %v53, %v89
  %v125 = vmul.f32 %v54, %v89
  %v126 = vmul.f32 %v55, %v89
  %v127 = vmul.f32 %v56, %v89
  %v128 = vmul.f32 %v57, %v89
  %v129 = vmul.f32 %v58, %v89
  %v130 = vmul.f32 %v59, %v89
  %v131 = vmul.f32 %v60, %v89
  %v132 = vmul.f32 %v61, %v89
  %v133 = vmul.f32 %v62, %v89
  %v134 = vmul.f32 %v63, %v89
  %v135 = vmul.f32 %v64, %v89
  %v136 = vmul.f32 %v65, %v89
  %v137 = vmul.f32 %v66, %v89
  %v138 = vmul.f32 %v67, %v89
  %v139 = vmul.f32 %v68, %v89
  %v140 = vmul.f32 %v69, %v89
  %v141 = vmul.f32 %v70, %v89
  %v142 = vmul.f32 %v71, %v89
  %v143 = vmul.f32 %v72, %v89
  %v144 = vmul.f32 %v73, %v89
  %v145 = vmul.f32 %v74, %v89
  %v146 = vmul.f32 %v75, %v89
  %v147 = vmul.f32 %v76, %v89
  %v148 = vmul.f32 %v77, %v89
  %v149 = vmul.f32 %v78, %v89
  %v150 = vmul.f32 %v79, %v89
  %v151 = vmul.f32 %v80, %v89
  %v152 = vmul.f32 %v81, %v89
  %v153 = vmul.f32 %v82, %v89
  %v154 = vmul.f32 %v83, %v89
  %v155 = vld [vmem:[%s2] sm:$0x1]
  %v157 = vlaneseq
  %v158 = vshrl.u32 %v157, 7
  %v159 = vsub.s32 0, %v158
  %v160 = vrot.slane %v155, %v159
  %v162 = vadd.f32 %v91, %v160
  %v163 = vadd.f32 %v92, %v160
  %v164 = vadd.f32 %v93, %v160
  %v165 = vadd.f32 %v94, %v160
  %v166 = vadd.f32 %v95, %v160
  %v167 = vadd.f32 %v96, %v160
  %v168 = vadd.f32 %v97, %v160
  %v169 = vadd.f32 %v98, %v160
  %v170 = vadd.f32 %v99, %v160
  %v171 = vadd.f32 %v100, %v160
  %v172 = vadd.f32 %v101, %v160
  %v173 = vadd.f32 %v102, %v160
  %v174 = vadd.f32 %v103, %v160
  %v175 = vadd.f32 %v104, %v160
  %v176 = vadd.f32 %v105, %v160
  %v177 = vadd.f32 %v106, %v160
  %v178 = vadd.f32 %v107, %v160
  %v179 = vadd.f32 %v108, %v160
  %v180 = vadd.f32 %v109, %v160
  %v181 = vadd.f32 %v110, %v160
  %v182 = vadd.f32 %v111, %v160
  %v183 = vadd.f32 %v112, %v160
  %v184 = vadd.f32 %v113, %v160
  %v185 = vadd.f32 %v114, %v160
  %v186 = vadd.f32 %v115, %v160
  %v187 = vadd.f32 %v116, %v160
  %v188 = vadd.f32 %v117, %v160
  %v189 = vadd.f32 %v118, %v160
  %v190 = vadd.f32 %v119, %v160
  %v191 = vadd.f32 %v120, %v160
  %v192 = vadd.f32 %v121, %v160
  %v193 = vadd.f32 %v122, %v160
  %v194 = vadd.f32 %v123, %v160
  %v195 = vadd.f32 %v124, %v160
  %v196 = vadd.f32 %v125, %v160
  %v197 = vadd.f32 %v126, %v160
  %v198 = vadd.f32 %v127, %v160
  %v199 = vadd.f32 %v128, %v160
  %v200 = vadd.f32 %v129, %v160
  %v201 = vadd.f32 %v130, %v160
  %v202 = vadd.f32 %v131, %v160
  %v203 = vadd.f32 %v132, %v160
  %v204 = vadd.f32 %v133, %v160
  %v205 = vadd.f32 %v134, %v160
  %v206 = vadd.f32 %v135, %v160
  %v207 = vadd.f32 %v136, %v160
  %v208 = vadd.f32 %v137, %v160
  %v209 = vadd.f32 %v138, %v160
  %v210 = vadd.f32 %v139, %v160
  %v211 = vadd.f32 %v140, %v160
  %v212 = vadd.f32 %v141, %v160
  %v213 = vadd.f32 %v142, %v160
  %v214 = vadd.f32 %v143, %v160
  %v215 = vadd.f32 %v144, %v160
  %v216 = vadd.f32 %v145, %v160
  %v217 = vadd.f32 %v146, %v160
  %v218 = vadd.f32 %v147, %v160
  %v219 = vadd.f32 %v148, %v160
  %v220 = vadd.f32 %v149, %v160
  %v221 = vadd.f32 %v150, %v160
  %v222 = vadd.f32 %v151, %v160
  %v223 = vadd.f32 %v152, %v160
  %v224 = vadd.f32 %v153, %v160
  %v225 = vadd.f32 %v154, %v160
  %v226 = vmax.f32 %v162, 0.0
  %v227 = vmax.f32 %v163, 0.0
  %v228 = vmax.f32 %v164, 0.0
  %v229 = vmax.f32 %v165, 0.0
  %v230 = vmax.f32 %v166, 0.0
  %v231 = vmax.f32 %v167, 0.0
  %v232 = vmax.f32 %v168, 0.0
  %v233 = vmax.f32 %v169, 0.0
  %v234 = vmax.f32 %v170, 0.0
  %v235 = vmax.f32 %v171, 0.0
  %v236 = vmax.f32 %v172, 0.0
  %v237 = vmax.f32 %v173, 0.0
  %v238 = vmax.f32 %v174, 0.0
  %v239 = vmax.f32 %v175, 0.0
  %v240 = vmax.f32 %v176, 0.0
  %v241 = vmax.f32 %v177, 0.0
  %v242 = vmax.f32 %v178, 0.0
  %v243 = vmax.f32 %v179, 0.0
  %v244 = vmax.f32 %v180, 0.0
  %v245 = vmax.f32 %v181, 0.0
  %v246 = vmax.f32 %v182, 0.0
  %v247 = vmax.f32 %v183, 0.0
  %v248 = vmax.f32 %v184, 0.0
  %v249 = vmax.f32 %v185, 0.0
  %v250 = vmax.f32 %v186, 0.0
  %v251 = vmax.f32 %v187, 0.0
  %v252 = vmax.f32 %v188, 0.0
  %v253 = vmax.f32 %v189, 0.0
  %v254 = vmax.f32 %v190, 0.0
  %v255 = vmax.f32 %v191, 0.0
  %v256 = vmax.f32 %v192, 0.0
  %v257 = vmax.f32 %v193, 0.0
  %v258 = vmax.f32 %v194, 0.0
  %v259 = vmax.f32 %v195, 0.0
  %v260 = vmax.f32 %v196, 0.0
  %v261 = vmax.f32 %v197, 0.0
  %v262 = vmax.f32 %v198, 0.0
  %v263 = vmax.f32 %v199, 0.0
  %v264 = vmax.f32 %v200, 0.0
  %v265 = vmax.f32 %v201, 0.0
  %v266 = vmax.f32 %v202, 0.0
  %v267 = vmax.f32 %v203, 0.0
  %v268 = vmax.f32 %v204, 0.0
  %v269 = vmax.f32 %v205, 0.0
  %v270 = vmax.f32 %v206, 0.0
  %v271 = vmax.f32 %v207, 0.0
  %v272 = vmax.f32 %v208, 0.0
  %v273 = vmax.f32 %v209, 0.0
  %v274 = vmax.f32 %v210, 0.0
  %v275 = vmax.f32 %v211, 0.0
  %v276 = vmax.f32 %v212, 0.0
  %v277 = vmax.f32 %v213, 0.0
  %v278 = vmax.f32 %v214, 0.0
  %v279 = vmax.f32 %v215, 0.0
  %v280 = vmax.f32 %v216, 0.0
  %v281 = vmax.f32 %v217, 0.0
  %v282 = vmax.f32 %v218, 0.0
  %v283 = vmax.f32 %v219, 0.0
  %v284 = vmax.f32 %v220, 0.0
  %v285 = vmax.f32 %v221, 0.0
  %v286 = vmax.f32 %v222, 0.0
  %v287 = vmax.f32 %v223, 0.0
  %v288 = vmax.f32 %v224, 0.0
  %v289 = vmax.f32 %v225, 0.0
  %v290 = vld [vmem:[%s3] sm:$0xff]
  %v291 = vld [vmem:[%s3 + $0x8] sm:$0xff]
  %v292 = vld [vmem:[%s4] sm:$0x1]
  %v294 = vlaneseq
  %v295 = vshrl.u32 %v294, 7
  %v296 = vsub.s32 0, %v295
  %v297 = vrot.slane %v292, %v296
  %vm299 = vcmask 130048
  %v301 = vsel %vm299, %v226, 0
  %v304 = vsel %vm299, %v227, 0
  %v307 = vsel %vm299, %v228, 0
  %v310 = vsel %vm299, %v229, 0
  %v313 = vsel %vm299, %v230, 0
  %v316 = vsel %vm299, %v231, 0
  %v319 = vsel %vm299, %v232, 0
  %v322 = vsel %vm299, %v233, 0
  %v325 = vsel %vm299, %v234, 0
  %v328 = vsel %vm299, %v235, 0
  %v331 = vsel %vm299, %v236, 0
  %v334 = vsel %vm299, %v237, 0
  %v337 = vsel %vm299, %v238, 0
  %v340 = vsel %vm299, %v239, 0
  %v343 = vsel %vm299, %v240, 0
  %v346 = vsel %vm299, %v241, 0
  %v349 = vsel %vm299, %v242, 0
  %v352 = vsel %vm299, %v243, 0
  %v355 = vsel %vm299, %v244, 0
  %v358 = vsel %vm299, %v245, 0
  %v361 = vsel %vm299, %v246, 0
  %v364 = vsel %vm299, %v247, 0
  %v367 = vsel %vm299, %v248, 0
  %v370 = vsel %vm299, %v249, 0
  %v373 = vsel %vm299, %v250, 0
  %v376 = vsel %vm299, %v251, 0
  %v379 = vsel %vm299, %v252, 0
  %v382 = vsel %vm299, %v253, 0
  %v385 = vsel %vm299, %v254, 0
  %v388 = vsel %vm299, %v255, 0
  %v391 = vsel %vm299, %v256, 0
  %v394 = vsel %vm299, %v257, 0
  %v397 = vsel %vm299, %v258, 0
  %v400 = vsel %vm299, %v259, 0
  %v403 = vsel %vm299, %v260, 0
  %v406 = vsel %vm299, %v261, 0
  %v409 = vsel %vm299, %v262, 0
  %v412 = vsel %vm299, %v263, 0
  %v415 = vsel %vm299, %v264, 0
  %v418 = vsel %vm299, %v265, 0
  %v421 = vsel %vm299, %v266, 0
  %v424 = vsel %vm299, %v267, 0
  %v427 = vsel %vm299, %v268, 0
  %v430 = vsel %vm299, %v269, 0
  %v433 = vsel %vm299, %v270, 0
  %v436 = vsel %vm299, %v271, 0
  %v439 = vsel %vm299, %v272, 0
  %v442 = vsel %vm299, %v273, 0
  %v445 = vsel %vm299, %v274, 0
  %v448 = vsel %vm299, %v275, 0
  %v451 = vsel %vm299, %v276, 0
  %v454 = vsel %vm299, %v277, 0
  %v457 = vsel %vm299, %v278, 0
  %v460 = vsel %vm299, %v279, 0
  %v463 = vsel %vm299, %v280, 0
  %v466 = vsel %vm299, %v281, 0
  %v469 = vsel %vm299, %v282, 0
  %v472 = vsel %vm299, %v283, 0
  %v475 = vsel %vm299, %v284, 0
  %v478 = vsel %vm299, %v285, 0
  %v481 = vsel %vm299, %v286, 0
  %v484 = vsel %vm299, %v287, 0
  %v487 = vsel %vm299, %v288, 0
  %v490 = vsel %vm299, %v289, 0
  %492 = vmatprep.subr.mxu0 0.0
  %493 = vmatpush1.msra.mxu0 0.0
  %494 = vmatprep.subr.mxu0 0.0
  %495 = vmatpush1.msra.mxu0 0.0
  %496 = vmatprep.subr.mxu0 0.0
  %497 = vmatpush1.msra.mxu0 0.0
  %498 = vmatprep.subr.mxu0 0.0
  %499 = vmatpush1.msra.mxu0 0.0
  %500 = vmatprep.subr.mxu0 0.0
  %501 = vmatpush1.msra.mxu0 0.0
  %502 = vmatprep.subr.mxu0 0.0
  %503 = vmatpush1.msra.mxu0 0.0
  %504 = vmatprep.subr.mxu0 0.0
  %505 = vmatpush1.msra.mxu0 0.0
  %506 = vmatprep.subr.mxu0 0.0
  %507 = vmatpush1.msra.mxu0 0.0
  %508 = vmatprep.subr.mxu0 0.0
  %509 = vmatpush1.msra.mxu0 0.0
  %510 = vmatprep.subr.mxu0 0.0
  %511 = vmatpush1.msra.mxu0 0.0
  %512 = vmatprep.subr.mxu0 0.0
  %513 = vmatpush1.msra.mxu0 0.0
  %514 = vmatprep.subr.mxu0 0.0
  %515 = vmatpush1.msra.mxu0 0.0
  %516 = vmatprep.subr.mxu0 0.0
  %517 = vmatpush1.msra.mxu0 0.0
  %518 = vmatprep.subr.mxu0 0.0
  %519 = vmatpush1.msra.mxu0 0.0
  %520 = vmatprep.subr.mxu0 0.0
  %521 = vmatpush1.msra.mxu0 %v291
  %522 = vmatprep.subr.mxu0 0.0
  %523 = vmatpush1.msra.mxu0 %v290
  %524 = vmatprep.subr.mxu0 0.0
  %525 = vmatpush2.msra.mxu0 0.0
  %526 = vmatprep.subr.mxu0 0.0
  %527 = vmatpush2.msra.mxu0 0.0
  %528 = vmatprep.subr.mxu0 0.0
  %529 = vmatpush2.msra.mxu0 0.0
  %530 = vmatprep.subr.mxu0 0.0
  %531 = vmatpush2.msra.mxu0 0.0
  %532 = vmatprep.subr.mxu0 0.0
  %533 = vmatpush2.msra.mxu0 0.0
  %534 = vmatprep.subr.mxu0 0.0
  %535 = vmatpush2.msra.mxu0 0.0
  %536 = vmatprep.subr.mxu0 0.0
  %537 = vmatpush2.msra.mxu0 0.0
  %538 = vmatprep.subr.mxu0 0.0
  %539 = vmatpush2.msra.mxu0 0.0
  %540 = vmatprep.subr.mxu0 0.0
  %541 = vmatpush2.msra.mxu0 0.0
  %542 = vmatprep.subr.mxu0 0.0
  %543 = vmatpush2.msra.mxu0 0.0
  %544 = vmatprep.subr.mxu0 0.0
  %545 = vmatpush2.msra.mxu0 0.0
  %546 = vmatprep.subr.mxu0 0.0
  %547 = vmatpush2.msra.mxu0 0.0
  %548 = vmatprep.subr.mxu0 0.0
  %549 = vmatpush2.msra.mxu0 0.0
  %550 = vmatprep.subr.mxu0 0.0
  %551 = vmatpush2.msra.mxu0 0.0
  %552 = vmatprep.subr.mxu0 0.0
  %553 = vmatpush2.msra.mxu0 0.0
  %554 = vmatprep.subr.mxu0 0.0
  %555 = vmatpush2.msra.mxu0 0.0
  %556 = vmatprep.mubr.f32.mxu0 0.0
  %557 = vmatmul.mubr.f32.gmra.mxu0 %v301
  %v558 = vpop.f32.mrf.mxu0
  %v559 = vadd.f32 %v297, %v558
  %v560 = vpop.f32.mrf.mxu0
  %561 = vmatprep.mubr.f32.mxu0 0.0
  %562 = vmatmul.mubr.f32.gmra.mxu0 %v304
  %v563 = vpop.f32.mrf.mxu0
  %v564 = vadd.f32 %v297, %v563
  %v565 = vpop.f32.mrf.mxu0
  %566 = vmatprep.mubr.f32.mxu0 0.0
  %567 = vmatmul.mubr.f32.gmra.mxu0 %v307
  %v568 = vpop.f32.mrf.mxu0
  %v569 = vadd.f32 %v297, %v568
  %v570 = vpop.f32.mrf.mxu0
  %571 = vmatprep.mubr.f32.mxu0 0.0
  %572 = vmatmul.mubr.f32.gmra.mxu0 %v310
  %v573 = vpop.f32.mrf.mxu0
  %v574 = vadd.f32 %v297, %v573
  %v575 = vpop.f32.mrf.mxu0
  %576 = vmatprep.mubr.f32.mxu0 0.0
  %577 = vmatmul.mubr.f32.gmra.mxu0 %v313
  %v578 = vpop.f32.mrf.mxu0
  %v579 = vadd.f32 %v297, %v578
  %v580 = vpop.f32.mrf.mxu0
  %581 = vmatprep.mubr.f32.mxu0 0.0
  %582 = vmatmul.mubr.f32.gmra.mxu0 %v316
  %v583 = vpop.f32.mrf.mxu0
  %v584 = vadd.f32 %v297, %v583
  %v585 = vpop.f32.mrf.mxu0
  %586 = vmatprep.mubr.f32.mxu0 0.0
  %587 = vmatmul.mubr.f32.gmra.mxu0 %v319
  %v588 = vpop.f32.mrf.mxu0
  %v589 = vadd.f32 %v297, %v588
  %v590 = vpop.f32.mrf.mxu0
  %591 = vmatprep.mubr.f32.mxu0 0.0
  %592 = vmatmul.mubr.f32.gmra.mxu0 %v322
  %v593 = vpop.f32.mrf.mxu0
  %v594 = vadd.f32 %v297, %v593
  %v595 = vpop.f32.mrf.mxu0
  %596 = vmatprep.mubr.f32.mxu0 0.0
  %597 = vmatmul.mubr.f32.gmra.mxu0 %v325
  %v598 = vpop.f32.mrf.mxu0
  %v599 = vadd.f32 %v297, %v598
  %v600 = vpop.f32.mrf.mxu0
  %601 = vmatprep.mubr.f32.mxu0 0.0
  %602 = vmatmul.mubr.f32.gmra.mxu0 %v328
  %v603 = vpop.f32.mrf.mxu0
  %v604 = vadd.f32 %v297, %v603
  %v605 = vpop.f32.mrf.mxu0
  %606 = vmatprep.mubr.f32.mxu0 0.0
  %607 = vmatmul.mubr.f32.gmra.mxu0 %v331
  %v608 = vpop.f32.mrf.mxu0
  %v609 = vadd.f32 %v297, %v608
  %v610 = vpop.f32.mrf.mxu0
  %611 = vmatprep.mubr.f32.mxu0 0.0
  %612 = vmatmul.mubr.f32.gmra.mxu0 %v334
  %v613 = vpop.f32.mrf.mxu0
  %v614 = vadd.f32 %v297, %v613
  %v615 = vpop.f32.mrf.mxu0
  %616 = vmatprep.mubr.f32.mxu0 0.0
  %617 = vmatmul.mubr.f32.gmra.mxu0 %v337
  %v618 = vpop.f32.mrf.mxu0
  %v619 = vadd.f32 %v297, %v618
  %v620 = vpop.f32.mrf.mxu0
  %621 = vmatprep.mubr.f32.mxu0 0.0
  %622 = vmatmul.mubr.f32.gmra.mxu0 %v340
  %v623 = vpop.f32.mrf.mxu0
  %v624 = vadd.f32 %v297, %v623
  %v625 = vpop.f32.mrf.mxu0
  %626 = vmatprep.mubr.f32.mxu0 0.0
  %627 = vmatmul.mubr.f32.gmra.mxu0 %v343
  %v628 = vpop.f32.mrf.mxu0
  %v629 = vadd.f32 %v297, %v628
  %v630 = vpop.f32.mrf.mxu0
  %631 = vmatprep.mubr.f32.mxu0 0.0
  %632 = vmatmul.mubr.f32.gmra.mxu0 %v346
  %v633 = vpop.f32.mrf.mxu0
  %v634 = vadd.f32 %v297, %v633
  %v635 = vpop.f32.mrf.mxu0
  %636 = vmatprep.mubr.f32.mxu0 0.0
  %637 = vmatmul.mubr.f32.gmra.mxu0 %v349
  %v638 = vpop.f32.mrf.mxu0
  %v639 = vadd.f32 %v297, %v638
  %v640 = vpop.f32.mrf.mxu0
  %641 = vmatprep.mubr.f32.mxu0 0.0
  %642 = vmatmul.mubr.f32.gmra.mxu0 %v352
  %v643 = vpop.f32.mrf.mxu0
  %v644 = vadd.f32 %v297, %v643
  %v645 = vpop.f32.mrf.mxu0
  %646 = vmatprep.mubr.f32.mxu0 0.0
  %647 = vmatmul.mubr.f32.gmra.mxu0 %v355
  %v648 = vpop.f32.mrf.mxu0
  %v649 = vadd.f32 %v297, %v648
  %v650 = vpop.f32.mrf.mxu0
  %651 = vmatprep.mubr.f32.mxu0 0.0
  %652 = vmatmul.mubr.f32.gmra.mxu0 %v358
  %v653 = vpop.f32.mrf.mxu0
  %v654 = vadd.f32 %v297, %v653
  %v655 = vpop.f32.mrf.mxu0
  %656 = vmatprep.mubr.f32.mxu0 0.0
  %657 = vmatmul.mubr.f32.gmra.mxu0 %v361
  %v658 = vpop.f32.mrf.mxu0
  %v659 = vadd.f32 %v297, %v658
  %v660 = vpop.f32.mrf.mxu0
  %661 = vmatprep.mubr.f32.mxu0 0.0
  %662 = vmatmul.mubr.f32.gmra.mxu0 %v364
  %v663 = vpop.f32.mrf.mxu0
  %v664 = vadd.f32 %v297, %v663
  %v665 = vpop.f32.mrf.mxu0
  %666 = vmatprep.mubr.f32.mxu0 0.0
  %667 = vmatmul.mubr.f32.gmra.mxu0 %v367
  %v668 = vpop.f32.mrf.mxu0
  %v669 = vadd.f32 %v297, %v668
  %v670 = vpop.f32.mrf.mxu0
  %671 = vmatprep.mubr.f32.mxu0 0.0
  %672 = vmatmul.mubr.f32.gmra.mxu0 %v370
  %v673 = vpop.f32.mrf.mxu0
  %v674 = vadd.f32 %v297, %v673
  %v675 = vpop.f32.mrf.mxu0
  %676 = vmatprep.mubr.f32.mxu0 0.0
  %677 = vmatmul.mubr.f32.gmra.mxu0 %v373
  %v678 = vpop.f32.mrf.mxu0
  %v679 = vadd.f32 %v297, %v678
  %v680 = vpop.f32.mrf.mxu0
  %681 = vmatprep.mubr.f32.mxu0 0.0
  %682 = vmatmul.mubr.f32.gmra.mxu0 %v376
  %v683 = vpop.f32.mrf.mxu0
  %v684 = vadd.f32 %v297, %v683
  %v685 = vpop.f32.mrf.mxu0
  %686 = vmatprep.mubr.f32.mxu0 0.0
  %687 = vmatmul.mubr.f32.gmra.mxu0 %v379
  %v688 = vpop.f32.mrf.mxu0
  %v689 = vadd.f32 %v297, %v688
  %v690 = vpop.f32.mrf.mxu0
  %691 = vmatprep.mubr.f32.mxu0 0.0
  %692 = vmatmul.mubr.f32.gmra.mxu0 %v382
  %v693 = vpop.f32.mrf.mxu0
  %v694 = vadd.f32 %v297, %v693
  %v695 = vpop.f32.mrf.mxu0
  %696 = vmatprep.mubr.f32.mxu0 0.0
  %697 = vmatmul.mubr.f32.gmra.mxu0 %v385
  %v698 = vpop.f32.mrf.mxu0
  %v699 = vadd.f32 %v297, %v698
  %v700 = vpop.f32.mrf.mxu0
  %701 = vmatprep.mubr.f32.mxu0 0.0
  %702 = vmatmul.mubr.f32.gmra.mxu0 %v388
  %v703 = vpop.f32.mrf.mxu0
  %v704 = vadd.f32 %v297, %v703
  %v705 = vpop.f32.mrf.mxu0
  %706 = vmatprep.mubr.f32.mxu0 0.0
  %707 = vmatmul.mubr.f32.gmra.mxu0 %v391
  %v708 = vpop.f32.mrf.mxu0
  %v709 = vadd.f32 %v297, %v708
  %v710 = vpop.f32.mrf.mxu0
  %711 = vmatprep.mubr.f32.mxu0 0.0
  %712 = vmatmul.mubr.f32.gmra.mxu0 %v394
  %v713 = vpop.f32.mrf.mxu0
  %v714 = vadd.f32 %v297, %v713
  %v715 = vpop.f32.mrf.mxu0
  %716 = vmatprep.mubr.f32.mxu0 0.0
  %717 = vmatmul.mubr.f32.gmra.mxu0 %v397
  %v718 = vpop.f32.mrf.mxu0
  %v719 = vadd.f32 %v297, %v718
  %v720 = vpop.f32.mrf.mxu0
  %721 = vmatprep.mubr.f32.mxu0 0.0
  %722 = vmatmul.mubr.f32.gmra.mxu0 %v400
  %v723 = vpop.f32.mrf.mxu0
  %v724 = vadd.f32 %v297, %v723
  %v725 = vpop.f32.mrf.mxu0
  %726 = vmatprep.mubr.f32.mxu0 0.0
  %727 = vmatmul.mubr.f32.gmra.mxu0 %v403
  %v728 = vpop.f32.mrf.mxu0
  %v729 = vadd.f32 %v297, %v728
  %v730 = vpop.f32.mrf.mxu0
  %731 = vmatprep.mubr.f32.mxu0 0.0
  %732 = vmatmul.mubr.f32.gmra.mxu0 %v406
  %v733 = vpop.f32.mrf.mxu0
  %v734 = vadd.f32 %v297, %v733
  %v735 = vpop.f32.mrf.mxu0
  %736 = vmatprep.mubr.f32.mxu0 0.0
  %737 = vmatmul.mubr.f32.gmra.mxu0 %v409
  %v738 = vpop.f32.mrf.mxu0
  %v739 = vadd.f32 %v297, %v738
  %v740 = vpop.f32.mrf.mxu0
  %741 = vmatprep.mubr.f32.mxu0 0.0
  %742 = vmatmul.mubr.f32.gmra.mxu0 %v412
  %v743 = vpop.f32.mrf.mxu0
  %v744 = vadd.f32 %v297, %v743
  %v745 = vpop.f32.mrf.mxu0
  %746 = vmatprep.mubr.f32.mxu0 0.0
  %747 = vmatmul.mubr.f32.gmra.mxu0 %v415
  %v748 = vpop.f32.mrf.mxu0
  %v749 = vadd.f32 %v297, %v748
  %v750 = vpop.f32.mrf.mxu0
  %751 = vmatprep.mubr.f32.mxu0 0.0
  %752 = vmatmul.mubr.f32.gmra.mxu0 %v418
  %v753 = vpop.f32.mrf.mxu0
  %v754 = vadd.f32 %v297, %v753
  %v755 = vpop.f32.mrf.mxu0
  %756 = vmatprep.mubr.f32.mxu0 0.0
  %757 = vmatmul.mubr.f32.gmra.mxu0 %v421
  %v758 = vpop.f32.mrf.mxu0
  %v759 = vadd.f32 %v297, %v758
  %v760 = vpop.f32.mrf.mxu0
  %761 = vmatprep.mubr.f32.mxu0 0.0
  %762 = vmatmul.mubr.f32.gmra.mxu0 %v424
  %v763 = vpop.f32.mrf.mxu0
  %v764 = vadd.f32 %v297, %v763
  %v765 = vpop.f32.mrf.mxu0
  %766 = vmatprep.mubr.f32.mxu0 0.0
  %767 = vmatmul.mubr.f32.gmra.mxu0 %v427
  %v768 = vpop.f32.mrf.mxu0
  %v769 = vadd.f32 %v297, %v768
  %v770 = vpop.f32.mrf.mxu0
  %771 = vmatprep.mubr.f32.mxu0 0.0
  %772 = vmatmul.mubr.f32.gmra.mxu0 %v430
  %v773 = vpop.f32.mrf.mxu0
  %v774 = vadd.f32 %v297, %v773
  %v775 = vpop.f32.mrf.mxu0
  %776 = vmatprep.mubr.f32.mxu0 0.0
  %777 = vmatmul.mubr.f32.gmra.mxu0 %v433
  %v778 = vpop.f32.mrf.mxu0
  %v779 = vadd.f32 %v297, %v778
  %v780 = vpop.f32.mrf.mxu0
  %781 = vmatprep.mubr.f32.mxu0 0.0
  %782 = vmatmul.mubr.f32.gmra.mxu0 %v436
  %v783 = vpop.f32.mrf.mxu0
  %v784 = vadd.f32 %v297, %v783
  %v785 = vpop.f32.mrf.mxu0
  %786 = vmatprep.mubr.f32.mxu0 0.0
  %787 = vmatmul.mubr.f32.gmra.mxu0 %v439
  %v788 = vpop.f32.mrf.mxu0
  %v789 = vadd.f32 %v297, %v788
  %v790 = vpop.f32.mrf.mxu0
  %791 = vmatprep.mubr.f32.mxu0 0.0
  %792 = vmatmul.mubr.f32.gmra.mxu0 %v442
  %v793 = vpop.f32.mrf.mxu0
  %v794 = vadd.f32 %v297, %v793
  %v795 = vpop.f32.mrf.mxu0
  %796 = vmatprep.mubr.f32.mxu0 0.0
  %797 = vmatmul.mubr.f32.gmra.mxu0 %v445
  %v798 = vpop.f32.mrf.mxu0
  %v799 = vadd.f32 %v297, %v798
  %v800 = vpop.f32.mrf.mxu0
  %801 = vmatprep.mubr.f32.mxu0 0.0
  %802 = vmatmul.mubr.f32.gmra.mxu0 %v448
  %v803 = vpop.f32.mrf.mxu0
  %v804 = vadd.f32 %v297, %v803
  %v805 = vpop.f32.mrf.mxu0
  %806 = vmatprep.mubr.f32.mxu0 0.0
  %807 = vmatmul.mubr.f32.gmra.mxu0 %v451
  %v808 = vpop.f32.mrf.mxu0
  %v809 = vadd.f32 %v297, %v808
  %v810 = vpop.f32.mrf.mxu0
  %811 = vmatprep.mubr.f32.mxu0 0.0
  %812 = vmatmul.mubr.f32.gmra.mxu0 %v454
  %v813 = vpop.f32.mrf.mxu0
  %v814 = vadd.f32 %v297, %v813
  %v815 = vpop.f32.mrf.mxu0
  %816 = vmatprep.mubr.f32.mxu0 0.0
  %817 = vmatmul.mubr.f32.gmra.mxu0 %v457
  %v818 = vpop.f32.mrf.mxu0
  %v819 = vadd.f32 %v297, %v818
  %v820 = vpop.f32.mrf.mxu0
  %821 = vmatprep.mubr.f32.mxu0 0.0
  %822 = vmatmul.mubr.f32.gmra.mxu0 %v460
  %v823 = vpop.f32.mrf.mxu0
  %v824 = vadd.f32 %v297, %v823
  %v825 = vpop.f32.mrf.mxu0
  %826 = vmatprep.mubr.f32.mxu0 0.0
  %827 = vmatmul.mubr.f32.gmra.mxu0 %v463
  %v828 = vpop.f32.mrf.mxu0
  %v829 = vadd.f32 %v297, %v828
  %v830 = vpop.f32.mrf.mxu0
  %831 = vmatprep.mubr.f32.mxu0 0.0
  %832 = vmatmul.mubr.f32.gmra.mxu0 %v466
  %v833 = vpop.f32.mrf.mxu0
  %v834 = vadd.f32 %v297, %v833
  %v835 = vpop.f32.mrf.mxu0
  %836 = vmatprep.mubr.f32.mxu0 0.0
  %837 = vmatmul.mubr.f32.gmra.mxu0 %v469
  %v838 = vpop.f32.mrf.mxu0
  %v839 = vadd.f32 %v297, %v838
  %v840 = vpop.f32.mrf.mxu0
  %841 = vmatprep.mubr.f32.mxu0 0.0
  %842 = vmatmul.mubr.f32.gmra.mxu0 %v472
  %v843 = vpop.f32.mrf.mxu0
  %v844 = vadd.f32 %v297, %v843
  %v845 = vpop.f32.mrf.mxu0
  %846 = vmatprep.mubr.f32.mxu0 0.0
  %847 = vmatmul.mubr.f32.gmra.mxu0 %v475
  %v848 = vpop.f32.mrf.mxu0
  %v849 = vadd.f32 %v297, %v848
  %v850 = vpop.f32.mrf.mxu0
  %851 = vmatprep.mubr.f32.mxu0 0.0
  %852 = vmatmul.mubr.f32.gmra.mxu0 %v478
  %v853 = vpop.f32.mrf.mxu0
  %v854 = vadd.f32 %v297, %v853
  %v855 = vpop.f32.mrf.mxu0
  %856 = vmatprep.mubr.f32.mxu0 0.0
  %857 = vmatmul.mubr.f32.gmra.mxu0 %v481
  %v858 = vpop.f32.mrf.mxu0
  %v859 = vadd.f32 %v297, %v858
  %v860 = vpop.f32.mrf.mxu0
  %861 = vmatprep.mubr.f32.mxu0 0.0
  %862 = vmatmul.mubr.f32.gmra.mxu0 %v484
  %v863 = vpop.f32.mrf.mxu0
  %v864 = vadd.f32 %v297, %v863
  %v865 = vpop.f32.mrf.mxu0
  %866 = vmatprep.mubr.f32.mxu0 0.0
  %867 = vmatmul.mubr.f32.gmra.mxu0 %v487
  %v868 = vpop.f32.mrf.mxu0
  %v869 = vadd.f32 %v297, %v868
  %v870 = vpop.f32.mrf.mxu0
  %871 = vmatprep.mubr.f32.mxu0 0.0
  %872 = vmatmul.mubr.f32.gmra.mxu0 %v490
  %v873 = vpop.f32.mrf.mxu0
  %v874 = vadd.f32 %v297, %v873
  %v875 = vpop.f32.mrf.mxu0
  %876 = vdwg.mxu0
  %v877 = vmax.f32 %v559, 0.0
  %v878 = vmax.f32 %v564, 0.0
  %v879 = vmax.f32 %v569, 0.0
  %v880 = vmax.f32 %v574, 0.0
  %v881 = vmax.f32 %v579, 0.0
  %v882 = vmax.f32 %v584, 0.0
  %v883 = vmax.f32 %v589, 0.0
  %v884 = vmax.f32 %v594, 0.0
  %v885 = vmax.f32 %v599, 0.0
  %v886 = vmax.f32 %v604, 0.0
  %v887 = vmax.f32 %v609, 0.0
  %v888 = vmax.f32 %v614, 0.0
  %v889 = vmax.f32 %v619, 0.0
  %v890 = vmax.f32 %v624, 0.0
  %v891 = vmax.f32 %v629, 0.0
  %v892 = vmax.f32 %v634, 0.0
  %v893 = vmax.f32 %v639, 0.0
  %v894 = vmax.f32 %v644, 0.0
  %v895 = vmax.f32 %v649, 0.0
  %v896 = vmax.f32 %v654, 0.0
  %v897 = vmax.f32 %v659, 0.0
  %v898 = vmax.f32 %v664, 0.0
  %v899 = vmax.f32 %v669, 0.0
  %v900 = vmax.f32 %v674, 0.0
  %v901 = vmax.f32 %v679, 0.0
  %v902 = vmax.f32 %v684, 0.0
  %v903 = vmax.f32 %v689, 0.0
  %v904 = vmax.f32 %v694, 0.0
  %v905 = vmax.f32 %v699, 0.0
  %v906 = vmax.f32 %v704, 0.0
  %v907 = vmax.f32 %v709, 0.0
  %v908 = vmax.f32 %v714, 0.0
  %v909 = vmax.f32 %v719, 0.0
  %v910 = vmax.f32 %v724, 0.0
  %v911 = vmax.f32 %v729, 0.0
  %v912 = vmax.f32 %v734, 0.0
  %v913 = vmax.f32 %v739, 0.0
  %v914 = vmax.f32 %v744, 0.0
  %v915 = vmax.f32 %v749, 0.0
  %v916 = vmax.f32 %v754, 0.0
  %v917 = vmax.f32 %v759, 0.0
  %v918 = vmax.f32 %v764, 0.0
  %v919 = vmax.f32 %v769, 0.0
  %v920 = vmax.f32 %v774, 0.0
  %v921 = vmax.f32 %v779, 0.0
  %v922 = vmax.f32 %v784, 0.0
  %v923 = vmax.f32 %v789, 0.0
  %v924 = vmax.f32 %v794, 0.0
  %v925 = vmax.f32 %v799, 0.0
  %v926 = vmax.f32 %v804, 0.0
  %v927 = vmax.f32 %v809, 0.0
  %v928 = vmax.f32 %v814, 0.0
  %v929 = vmax.f32 %v819, 0.0
  %v930 = vmax.f32 %v824, 0.0
  %v931 = vmax.f32 %v829, 0.0
  %v932 = vmax.f32 %v834, 0.0
  %v933 = vmax.f32 %v839, 0.0
  %v934 = vmax.f32 %v844, 0.0
  %v935 = vmax.f32 %v849, 0.0
  %v936 = vmax.f32 %v854, 0.0
  %v937 = vmax.f32 %v859, 0.0
  %v938 = vmax.f32 %v864, 0.0
  %v939 = vmax.f32 %v869, 0.0
  %v940 = vmax.f32 %v874, 0.0
  %vm941 = vcmask 64512
  %942 = vst.msk [vmem:[%s5] sm:$0xff] %vm941, %v877
  %943 = vst.msk [vmem:[%s5 + $0x8] sm:$0xff] %vm941, %v878
  %944 = vst.msk [vmem:[%s5 + $0x10] sm:$0xff] %vm941, %v879
  %945 = vst.msk [vmem:[%s5 + $0x18] sm:$0xff] %vm941, %v880
  %946 = vst.msk [vmem:[%s5 + $0x20] sm:$0xff] %vm941, %v881
  %947 = vst.msk [vmem:[%s5 + $0x28] sm:$0xff] %vm941, %v882
  %948 = vst.msk [vmem:[%s5 + $0x30] sm:$0xff] %vm941, %v883
  %949 = vst.msk [vmem:[%s5 + $0x38] sm:$0xff] %vm941, %v884
  %950 = vst.msk [vmem:[%s5 + $0x40] sm:$0xff] %vm941, %v885
  %951 = vst.msk [vmem:[%s5 + $0x48] sm:$0xff] %vm941, %v886
  %952 = vst.msk [vmem:[%s5 + $0x50] sm:$0xff] %vm941, %v887
  %953 = vst.msk [vmem:[%s5 + $0x58] sm:$0xff] %vm941, %v888
  %954 = vst.msk [vmem:[%s5 + $0x60] sm:$0xff] %vm941, %v889
  %955 = vst.msk [vmem:[%s5 + $0x68] sm:$0xff] %vm941, %v890
  %956 = vst.msk [vmem:[%s5 + $0x70] sm:$0xff] %vm941, %v891
  %957 = vst.msk [vmem:[%s5 + $0x78] sm:$0xff] %vm941, %v892
  %958 = vst.msk [vmem:[%s5 + $0x80] sm:$0xff] %vm941, %v893
  %959 = vst.msk [vmem:[%s5 + $0x88] sm:$0xff] %vm941, %v894
  %960 = vst.msk [vmem:[%s5 + $0x90] sm:$0xff] %vm941, %v895
  %961 = vst.msk [vmem:[%s5 + $0x98] sm:$0xff] %vm941, %v896
  %962 = vst.msk [vmem:[%s5 + $0xa0] sm:$0xff] %vm941, %v897
  %963 = vst.msk [vmem:[%s5 + $0xa8] sm:$0xff] %vm941, %v898
  %964 = vst.msk [vmem:[%s5 + $0xb0] sm:$0xff] %vm941, %v899
  %965 = vst.msk [vmem:[%s5 + $0xb8] sm:$0xff] %vm941, %v900
  %966 = vst.msk [vmem:[%s5 + $0xc0] sm:$0xff] %vm941, %v901
  %967 = vst.msk [vmem:[%s5 + $0xc8] sm:$0xff] %vm941, %v902
  %968 = vst.msk [vmem:[%s5 + $0xd0] sm:$0xff] %vm941, %v903
  %969 = vst.msk [vmem:[%s5 + $0xd8] sm:$0xff] %vm941, %v904
  %970 = vst.msk [vmem:[%s5 + $0xe0] sm:$0xff] %vm941, %v905
  %971 = vst.msk [vmem:[%s5 + $0xe8] sm:$0xff] %vm941, %v906
  %972 = vst.msk [vmem:[%s5 + $0xf0] sm:$0xff] %vm941, %v907
  %973 = vst.msk [vmem:[%s5 + $0xf8] sm:$0xff] %vm941, %v908
  %974 = vst.msk [vmem:[%s5 + $0x100] sm:$0xff] %vm941, %v909
  %975 = vst.msk [vmem:[%s5 + $0x108] sm:$0xff] %vm941, %v910
  %976 = vst.msk [vmem:[%s5 + $0x110] sm:$0xff] %vm941, %v911
  %977 = vst.msk [vmem:[%s5 + $0x118] sm:$0xff] %vm941, %v912
  %978 = vst.msk [vmem:[%s5 + $0x120] sm:$0xff] %vm941, %v913
  %979 = vst.msk [vmem:[%s5 + $0x128] sm:$0xff] %vm941, %v914
  %980 = vst.msk [vmem:[%s5 + $0x130] sm:$0xff] %vm941, %v915
  %981 = vst.msk [vmem:[%s5 + $0x138] sm:$0xff] %vm941, %v916
  %982 = vst.msk [vmem:[%s5 + $0x140] sm:$0xff] %vm941, %v917
  %983 = vst.msk [vmem:[%s5 + $0x148] sm:$0xff] %vm941, %v918
  %984 = vst.msk [vmem:[%s5 + $0x150] sm:$0xff] %vm941, %v919
  %985 = vst.msk [vmem:[%s5 + $0x158] sm:$0xff] %vm941, %v920
  %986 = vst.msk [vmem:[%s5 + $0x160] sm:$0xff] %vm941, %v921
  %987 = vst.msk [vmem:[%s5 + $0x168] sm:$0xff] %vm941, %v922
  %988 = vst.msk [vmem:[%s5 + $0x170] sm:$0xff] %vm941, %v923
  %989 = vst.msk [vmem:[%s5 + $0x178] sm:$0xff] %vm941, %v924
  %990 = vst.msk [vmem:[%s5 + $0x180] sm:$0xff] %vm941, %v925
  %991 = vst.msk [vmem:[%s5 + $0x188] sm:$0xff] %vm941, %v926
  %992 = vst.msk [vmem:[%s5 + $0x190] sm:$0xff] %vm941, %v927
  %993 = vst.msk [vmem:[%s5 + $0x198] sm:$0xff] %vm941, %v928
  %994 = vst.msk [vmem:[%s5 + $0x1a0] sm:$0xff] %vm941, %v929
  %995 = vst.msk [vmem:[%s5 + $0x1a8] sm:$0xff] %vm941, %v930
  %996 = vst.msk [vmem:[%s5 + $0x1b0] sm:$0xff] %vm941, %v931
  %997 = vst.msk [vmem:[%s5 + $0x1b8] sm:$0xff] %vm941, %v932
  %998 = vst.msk [vmem:[%s5 + $0x1c0] sm:$0xff] %vm941, %v933
  %999 = vst.msk [vmem:[%s5 + $0x1c8] sm:$0xff] %vm941, %v934
  %1000 = vst.msk [vmem:[%s5 + $0x1d0] sm:$0xff] %vm941, %v935
  %1001 = vst.msk [vmem:[%s5 + $0x1d8] sm:$0xff] %vm941, %v936
  %1002 = vst.msk [vmem:[%s5 + $0x1e0] sm:$0xff] %vm941, %v937
  %1003 = vst.msk [vmem:[%s5 + $0x1e8] sm:$0xff] %vm941, %v938
  %1004 = vst.msk [vmem:[%s5 + $0x1f0] sm:$0xff] %vm941, %v939
  %1005 = vst.msk [vmem:[%s5 + $0x1f8] sm:$0xff] %vm941, %v940
  // Predicated region
  $region22: #{tpu_custom_call.1} parent=0 // pred_check
    _
  $region23: #{tpu_custom_call.1} parent=0 // pred_check_branch
    %1007 = sbr.rel (0) target = $region25
  $region24: #{tpu_custom_call.1} parent=0 // pred_region
    _
  $region25: #{tpu_custom_call.1} parent=0 // pred_fallthru
    _
  // Predicated region
  $region26: #{tpu_custom_call.1} parent=0 // pred_check
    _
  $region27: #{tpu_custom_call.1} parent=0 // pred_check_branch
    %1009 = sbr.rel (0) target = $region29
  $region28: #{tpu_custom_call.1} parent=0 // pred_region
    _
  $region29: #{tpu_custom_call.1} parent=0 // pred_fallthru
    _

</llo_original>
